<compile_context>
chip_gen: v5e
topology: v5e:2x2
jax: 0.10.0
libtpu: 0.0.40
codegen_flags: <defaults>
</compile_context>

<pallas_src>
import functools

import jax
import jax.numpy as jnp
from jax import lax
from jax.experimental import pallas as pl
from jax.experimental.pallas import tpu as pltpu


# ----------------------------------------------------------------------------
# Fused kernel: Bt batch elements per grid step.
#   qkv = x @ W_qkv                          (stacked (Bt*T, 3E), f32 acc)
#   per head h (per batch): softmax(causal(q_h k_h^T)) @ v_h
#   acc += head_out_h @ Wproj[h*Dh:(h+1)*Dh, :]   (projection accumulation)
#   out = acc + bias                         (lane-dense (Bt*T, E) store)
# The C**-0.5 scale (C = n_embd, as in the PyTorch reference) is already baked
# into the q columns of W_qkv by the wrapper.
# ----------------------------------------------------------------------------
def _fused_mha_kernel(x_ref, wqkv_ref, wp_ref, b_ref, o_ref, *,
                      num_heads, head_size, seq_len, mxu_dtype, approx_recip):
    rows, _ = x_ref.shape            # rows = Bt * T
    T = seq_len
    Bt = rows // T
    E = num_heads * head_size

    x = x_ref[...].astype(mxu_dtype)

    # q | k | v for all heads and all Bt batches in ONE matmul: (Bt*T, 3E).
    qkv = jnp.dot(x, wqkv_ref[...], preferred_element_type=jnp.float32)

    # Causal mask, hoisted out of the head loop.  Finite negative (NaN-safe).
    row_ids = lax.broadcasted_iota(jnp.int32, (T, T), 0)
    col_ids = lax.broadcasted_iota(jnp.int32, (T, T), 1)
    causal = col_ids <= row_ids
    neg_big = jnp.float32(-1e30)

    acc = jnp.zeros((rows, E), jnp.float32)          # projection accumulator

    for h in range(num_heads):                       # static loop, static slices
        lo = h * head_size
        hi = (h + 1) * head_size
        q_h = qkv[:, lo:hi].reshape(Bt, T, head_size).astype(mxu_dtype)
        k_h = qkv[:, E + lo:E + hi].reshape(Bt, T, head_size).astype(mxu_dtype)
        v_h = qkv[:, 2 * E + lo:2 * E + hi].reshape(Bt, T, head_size).astype(mxu_dtype)

        # q_h @ k_h^T: contract the Dh axes, batched over Bt (no transpose).
        s = jnp.einsum('btd,bsd->bts', q_h, k_h,
                       preferred_element_type=jnp.float32)
        s = jnp.where(causal, s, neg_big)

        # Numerically stable softmax; divide-free (reciprocal of (Bt,T,1) denom).
        m = jnp.max(s, axis=-1, keepdims=True)
        e = jnp.exp(s - m)
        denom = jnp.sum(e, axis=-1, keepdims=True)
        if approx_recip:
            inv = pl.reciprocal(denom, approx=True)  # EUP slot, ~free
        else:
            inv = 1.0 / denom                        # exact, but only (.,T,1)
        p = e * inv

        out_h = jnp.einsum('bts,bsd->btd', p.astype(mxu_dtype), v_h,
                           preferred_element_type=jnp.float32)
        out_h = out_h.reshape(rows, head_size)

        # Per-head projection accumulation == concat(heads) @ Wproj.
        acc = acc + jnp.dot(out_h.astype(mxu_dtype), wp_ref[lo:hi, :],
                            preferred_element_type=jnp.float32)

    o_ref[...] = (acc + b_ref[...]).astype(o_ref.dtype)


def _pick_batch_tile(B, T, max_rows=512):
    """Largest divisor Bt of B such that Bt*T <= max_rows (at least 1)."""
    bt = 1
    for cand in range(1, B + 1):
        if B % cand == 0 and cand * T <= max_rows:
            bt = cand
    return bt


# ----------------------------------------------------------------------------
# Full module forward
# ----------------------------------------------------------------------------
@functools.partial(jax.jit, static_argnames=("mxu_dtype", "approx_recip"))
def multi_head_attention(x, wq, wk, wv, w_proj, b_proj, *,
                         mxu_dtype=jnp.bfloat16, approx_recip=True):
    """
    x        : (B, T, C)
    wq/wk/wv : (H, C, Dh)  per-head weights, already transposed for x @ W
    w_proj   : (E, E)      already transposed for y @ W   (E = H*Dh = C)
    b_proj   : (1, E)
    mxu_dtype: MXU operand dtype.  bf16 recommended on v5e/v6e/v7x (f32
               accumulation always); float32 gives the exact path.
    approx_recip: use the approximate EUP reciprocal for the softmax
               denominator (independent of mxu_dtype).
    returns  : (B, T, E)
    """
    B, T, C = x.shape
    H, _, Dh = wq.shape
    E = H * Dh

    scale = jnp.float32(C) ** jnp.float32(-0.5)   # C**-0.5, as in the reference

    # One-time packing: (H, C, Dh) -> (C, H*Dh); concat q|k|v -> (C, 3E).
    # The softmax scale is baked into the q columns (zero in-kernel cost).
    def pack(w):
        return jnp.transpose(w, (1, 0, 2)).reshape(C, E)

    wqkv = jnp.concatenate([pack(wq) * scale, pack(wk), pack(wv)],
                           axis=1).astype(mxu_dtype)
    wp = w_proj.astype(mxu_dtype)
    bp = b_proj.astype(jnp.float32)

    Bt = _pick_batch_tile(B, T)
    x2d = x.reshape(B * T, C)                     # lane/sublane-dense 2-D slab

    kernel = functools.partial(
        _fused_mha_kernel, num_heads=H, head_size=Dh, seq_len=T,
        mxu_dtype=mxu_dtype, approx_recip=approx_recip)

    out2d = pl.pallas_call(
        kernel,
        out_shape=jax.ShapeDtypeStruct((B * T, E), x.dtype),
        grid_spec=pltpu.PrefetchScalarGridSpec(
            num_scalar_prefetch=0,
            grid=(B // Bt,),
            in_specs=[
                pl.BlockSpec((Bt * T, C), lambda i: (i, 0)),   # activations
                pl.BlockSpec((C, 3 * E), lambda i: (0, 0)),    # W_qkv (resident)
                pl.BlockSpec((E, E), lambda i: (0, 0)),        # W_proj (resident)
                pl.BlockSpec((1, E), lambda i: (0, 0)),        # bias
            ],
            out_specs=pl.BlockSpec((Bt * T, E), lambda i: (i, 0)),
        ),
        compiler_params=pltpu.CompilerParams(
            dimension_semantics=("parallel",)),   # batch-tile axis -> megacore/2 TCs
    )(x2d, wqkv, wp, bp)

    # dropout (eval mode) -> identity
    return out2d.reshape(B, T, E)


if __name__ == "__main__":
    # Small shapes consistent with the module:
    #   block_size = T = 8, num_heads = 4, head_size = 8, n_embd = 32, batch = 2
    B, T, H, Dh = 2, 8, 4, 8
    C = H * Dh  # n_embd = 32

    key = jax.random.PRNGKey(0)
    kx, kq, kk, kv, kw, kb = jax.random.split(key, 6)

    x = jax.random.normal(kx, (B, T, C), dtype=jnp.float32)

    lim = 1.0 / jnp.sqrt(jnp.float32(C))
    wq = jax.random.uniform(kq, (H, C, Dh), jnp.float32, -lim, lim)
    wk = jax.random.uniform(kk, (H, C, Dh), jnp.float32, -lim, lim)
    wv = jax.random.uniform(kv, (H, C, Dh), jnp.float32, -lim, lim)
    w_proj = jax.random.uniform(kw, (C, C), jnp.float32, -lim, lim)
    b_proj = jax.random.uniform(kb, (1, C), jnp.float32, -lim, lim)

    # Pure-JAX reference (same math as the PyTorch module, eval mode).
    def ref(xx):
        scale = C ** -0.5
        mask = jnp.tril(jnp.ones((T, T), bool))
        outs = []
        for h in range(H):
            q = xx @ wq[h]
            k = xx @ wk[h]
            v = xx @ wv[h]
            wei = (q @ jnp.swapaxes(k, -2, -1)) * scale
            wei = jnp.where(mask, wei, -jnp.inf)
            wei = jax.nn.softmax(wei, axis=-1)
            outs.append(wei @ v)
        cat = jnp.concatenate(outs, axis=-1)
        return cat @ w_proj + b_proj

    expected = ref(x)

    # Exact path (f32 MXU operands, exact reciprocal) — explicit exactness.
    out_f32 = multi_head_attention(x, wq, wk, wv, w_proj, b_proj,
                                   mxu_dtype=jnp.float32, approx_recip=False)
    jax.block_until_ready(out_f32)
    err_f32 = float(jnp.max(jnp.abs(out_f32 - expected)))
    assert jnp.allclose(out_f32, expected, atol=1e-4, rtol=1e-4), err_f32

    # Fast path (bf16 MXU operands, f32 accumulation, approx reciprocal) —
    # recommended default on v5e / v6e / v7x.  Tolerance reflects bf16 operand
    # rounding + approx reciprocal only.
    out_bf16 = multi_head_attention(x, wq, wk, wv, w_proj, b_proj)
    jax.block_until_ready(out_bf16)
    err_bf16 = float(jnp.max(jnp.abs(out_bf16 - expected)))
    assert jnp.allclose(out_bf16, expected, atol=5e-2, rtol=5e-2), err_bf16

    print("KERNEL_OK")
</pallas_src>

<mosaic_0001>
module attributes {stable_mosaic.version = 11 : i64} {
  func.func @_fused_mha_kernel(%arg0: i32, %arg1: memref<16x32xf32, #tpu.memory_space<vmem>>, %arg2: memref<32x96xf32, #tpu.memory_space<vmem>>, %arg3: memref<32x32xf32, #tpu.memory_space<vmem>>, %arg4: memref<1x32xf32, #tpu.memory_space<vmem>>, %arg5: memref<16x32xf32, #tpu.memory_space<vmem>>) attributes {dimension_semantics = [#tpu.dimension_semantics<parallel>], iteration_bounds = array<i64: 1>, scalar_prefetch = 0 : i64, scratch_operands = 0 : i64, tpu.core_type = #tpu.core_type<tc>, window_params = [{transform_indices = @transform_0, window_bounds = array<i64: 16, 32>}, {pipeline_mode = #tpu.pipeline_mode<synchronous>, transform_indices = @transform_1, window_bounds = array<i64: 32, 96>}, {pipeline_mode = #tpu.pipeline_mode<synchronous>, transform_indices = @transform_2, window_bounds = array<i64: 32, 32>}, {pipeline_mode = #tpu.pipeline_mode<synchronous>, transform_indices = @transform_3, window_bounds = array<i64: 1, 32>}, {transform_indices = @transform_4, window_bounds = array<i64: 16, 32>}]} {
    %c0 = arith.constant 0 : index
    %c0_0 = arith.constant 0 : index
    %0 = vector.load %arg1[%c0, %c0_0] : memref<16x32xf32, #tpu.memory_space<vmem>>, vector<16x32xf32>
    %c0_1 = arith.constant 0 : index
    %c0_2 = arith.constant 0 : index
    %1 = vector.load %arg2[%c0_1, %c0_2] : memref<32x96xf32, #tpu.memory_space<vmem>>, vector<32x96xf32>
    %cst = arith.constant dense<0.000000e+00> : vector<16x96xf32>
    %2 = tpu.matmul %0, %1, %cst {dimension_numbers = #tpu.dot_dimension_numbers<[1], [0], [0], [1], [0, 0, 1, 1], [], []>} : vector<16x32xf32>, vector<32x96xf32>, vector<16x96xf32> -> vector<16x96xf32>
    %3 = tpu.iota {dimensions = array<i32: 0>} : vector<8x8xi32>
    %4 = tpu.iota {dimensions = array<i32: 1>} : vector<8x8xi32>
    %5 = arith.cmpi sle, %4, %3 : vector<8x8xi32>
    %cst_3 = arith.constant 0.000000e+00 : f32
    %6 = vector.broadcast %cst_3 : f32 to vector<16x32xf32>
    %7 = vector.extract_strided_slice %2 {offsets = [0, 0], sizes = [16, 8], strides = [1, 1]} : vector<16x96xf32> to vector<16x8xf32>
    %8 = vector.shape_cast %7 : vector<16x8xf32> to vector<2x8x8xf32>
    %9 = vector.extract_strided_slice %2 {offsets = [0, 32], sizes = [16, 8], strides = [1, 1]} : vector<16x96xf32> to vector<16x8xf32>
    %10 = vector.shape_cast %9 : vector<16x8xf32> to vector<2x8x8xf32>
    %11 = vector.extract_strided_slice %2 {offsets = [0, 64], sizes = [16, 8], strides = [1, 1]} : vector<16x96xf32> to vector<16x8xf32>
    %12 = vector.shape_cast %11 : vector<16x8xf32> to vector<2x8x8xf32>
    "tpu.trace_start"() <{level = 10 : i32, message = "btd,bsd->bts"}> : () -> ()
    %cst_4 = arith.constant dense<0.000000e+00> : vector<2x8x8xf32>
    %13 = tpu.matmul %8, %10, %cst_4 {dimension_numbers = #tpu.dot_dimension_numbers<[2], [2], [1], [1], [0, 0, 0, 1, 1, 1], [0], [0]>} : vector<2x8x8xf32>, vector<2x8x8xf32>, vector<2x8x8xf32> -> vector<2x8x8xf32>
    %cst_5 = arith.constant -1.000000e+30 : f32
    "tpu.trace_stop"() : () -> ()
    %14 = vector.shape_cast %5 : vector<8x8xi1> to vector<1x8x8xi1>
    %15 = vector.broadcast %14 : vector<1x8x8xi1> to vector<2x8x8xi1>
    %16 = vector.broadcast %cst_5 : f32 to vector<2x8x8xf32>
    %17 = arith.select %15, %13, %16 : vector<2x8x8xi1>, vector<2x8x8xf32>
    %cst_6 = arith.constant dense<0xFF800000> : vector<2x8xf32>
    %18 = vector.multi_reduction <maximumf>, %17, %cst_6 [2] : vector<2x8x8xf32> to vector<2x8xf32>
    %19 = vector.shape_cast %18 : vector<2x8xf32> to vector<2x8x1xf32>
    %20 = vector.broadcast %19 : vector<2x8x1xf32> to vector<2x8x8xf32>
    %21 = arith.subf %17, %20 : vector<2x8x8xf32>
    %22 = math.exp %21 : vector<2x8x8xf32>
    %cst_7 = arith.constant dense<0.000000e+00> : vector<2x8xf32>
    %23 = vector.multi_reduction <add>, %22, %cst_7 [2] : vector<2x8x8xf32> to vector<2x8xf32>
    %24 = vector.shape_cast %23 : vector<2x8xf32> to vector<2x8x1xf32>
    %cst_8 = arith.constant 1.000000e+00 : f32
    %25 = vector.broadcast %cst_8 : f32 to vector<2x8x1xf32>
    %26 = arith.divf %25, %24 : vector<2x8x1xf32>
    %27 = vector.broadcast %26 : vector<2x8x1xf32> to vector<2x8x8xf32>
    %28 = arith.mulf %22, %27 : vector<2x8x8xf32>
    "tpu.trace_start"() <{level = 10 : i32, message = "bts,bsd->btd"}> : () -> ()
    %cst_9 = arith.constant dense<0.000000e+00> : vector<2x8x8xf32>
    %29 = tpu.matmul %28, %12, %cst_9 {dimension_numbers = #tpu.dot_dimension_numbers<[2], [1], [1], [2], [0, 0, 0, 1, 1, 2], [0], [0]>} : vector<2x8x8xf32>, vector<2x8x8xf32>, vector<2x8x8xf32> -> vector<2x8x8xf32>
    "tpu.trace_stop"() : () -> ()
    %30 = vector.shape_cast %29 : vector<2x8x8xf32> to vector<16x8xf32>
    %c0_10 = arith.constant 0 : index
    %c0_11 = arith.constant 0 : index
    %31 = vector.load %arg3[%c0_10, %c0_11] : memref<32x32xf32, #tpu.memory_space<vmem>>, vector<8x32xf32>
    %cst_12 = arith.constant dense<0.000000e+00> : vector<16x32xf32>
    %32 = tpu.matmul %30, %31, %cst_12 {dimension_numbers = #tpu.dot_dimension_numbers<[1], [0], [0], [1], [0, 0, 1, 1], [], []>} : vector<16x8xf32>, vector<8x32xf32>, vector<16x32xf32> -> vector<16x32xf32>
    %33 = arith.addf %6, %32 : vector<16x32xf32>
    %34 = vector.extract_strided_slice %2 {offsets = [0, 8], sizes = [16, 8], strides = [1, 1]} : vector<16x96xf32> to vector<16x8xf32>
    %35 = vector.shape_cast %34 : vector<16x8xf32> to vector<2x8x8xf32>
    %36 = vector.extract_strided_slice %2 {offsets = [0, 40], sizes = [16, 8], strides = [1, 1]} : vector<16x96xf32> to vector<16x8xf32>
    %37 = vector.shape_cast %36 : vector<16x8xf32> to vector<2x8x8xf32>
    %38 = vector.extract_strided_slice %2 {offsets = [0, 72], sizes = [16, 8], strides = [1, 1]} : vector<16x96xf32> to vector<16x8xf32>
    %39 = vector.shape_cast %38 : vector<16x8xf32> to vector<2x8x8xf32>
    "tpu.trace_start"() <{level = 10 : i32, message = "btd,bsd->bts"}> : () -> ()
    %cst_13 = arith.constant dense<0.000000e+00> : vector<2x8x8xf32>
    %40 = tpu.matmul %35, %37, %cst_13 {dimension_numbers = #tpu.dot_dimension_numbers<[2], [2], [1], [1], [0, 0, 0, 1, 1, 1], [0], [0]>} : vector<2x8x8xf32>, vector<2x8x8xf32>, vector<2x8x8xf32> -> vector<2x8x8xf32>
    %cst_14 = arith.constant -1.000000e+30 : f32
    "tpu.trace_stop"() : () -> ()
    %41 = vector.shape_cast %5 : vector<8x8xi1> to vector<1x8x8xi1>
    %42 = vector.broadcast %41 : vector<1x8x8xi1> to vector<2x8x8xi1>
    %43 = vector.broadcast %cst_14 : f32 to vector<2x8x8xf32>
    %44 = arith.select %42, %40, %43 : vector<2x8x8xi1>, vector<2x8x8xf32>
    %cst_15 = arith.constant dense<0xFF800000> : vector<2x8xf32>
    %45 = vector.multi_reduction <maximumf>, %44, %cst_15 [2] : vector<2x8x8xf32> to vector<2x8xf32>
    %46 = vector.shape_cast %45 : vector<2x8xf32> to vector<2x8x1xf32>
    %47 = vector.broadcast %46 : vector<2x8x1xf32> to vector<2x8x8xf32>
    %48 = arith.subf %44, %47 : vector<2x8x8xf32>
    %49 = math.exp %48 : vector<2x8x8xf32>
    %cst_16 = arith.constant dense<0.000000e+00> : vector<2x8xf32>
    %50 = vector.multi_reduction <add>, %49, %cst_16 [2] : vector<2x8x8xf32> to vector<2x8xf32>
    %51 = vector.shape_cast %50 : vector<2x8xf32> to vector<2x8x1xf32>
    %cst_17 = arith.constant 1.000000e+00 : f32
    %52 = vector.broadcast %cst_17 : f32 to vector<2x8x1xf32>
    %53 = arith.divf %52, %51 : vector<2x8x1xf32>
    %54 = vector.broadcast %53 : vector<2x8x1xf32> to vector<2x8x8xf32>
    %55 = arith.mulf %49, %54 : vector<2x8x8xf32>
    "tpu.trace_start"() <{level = 10 : i32, message = "bts,bsd->btd"}> : () -> ()
    %cst_18 = arith.constant dense<0.000000e+00> : vector<2x8x8xf32>
    %56 = tpu.matmul %55, %39, %cst_18 {dimension_numbers = #tpu.dot_dimension_numbers<[2], [1], [1], [2], [0, 0, 0, 1, 1, 2], [0], [0]>} : vector<2x8x8xf32>, vector<2x8x8xf32>, vector<2x8x8xf32> -> vector<2x8x8xf32>
    "tpu.trace_stop"() : () -> ()
    %57 = vector.shape_cast %56 : vector<2x8x8xf32> to vector<16x8xf32>
    %c8 = arith.constant 8 : index
    %c0_19 = arith.constant 0 : index
    %58 = vector.load %arg3[%c8, %c0_19] : memref<32x32xf32, #tpu.memory_space<vmem>>, vector<8x32xf32>
    %cst_20 = arith.constant dense<0.000000e+00> : vector<16x32xf32>
    %59 = tpu.matmul %57, %58, %cst_20 {dimension_numbers = #tpu.dot_dimension_numbers<[1], [0], [0], [1], [0, 0, 1, 1], [], []>} : vector<16x8xf32>, vector<8x32xf32>, vector<16x32xf32> -> vector<16x32xf32>
    %60 = arith.addf %33, %59 : vector<16x32xf32>
    %61 = vector.extract_strided_slice %2 {offsets = [0, 16], sizes = [16, 8], strides = [1, 1]} : vector<16x96xf32> to vector<16x8xf32>
    %62 = vector.shape_cast %61 : vector<16x8xf32> to vector<2x8x8xf32>
    %63 = vector.extract_strided_slice %2 {offsets = [0, 48], sizes = [16, 8], strides = [1, 1]} : vector<16x96xf32> to vector<16x8xf32>
    %64 = vector.shape_cast %63 : vector<16x8xf32> to vector<2x8x8xf32>
    %65 = vector.extract_strided_slice %2 {offsets = [0, 80], sizes = [16, 8], strides = [1, 1]} : vector<16x96xf32> to vector<16x8xf32>
    %66 = vector.shape_cast %65 : vector<16x8xf32> to vector<2x8x8xf32>
    "tpu.trace_start"() <{level = 10 : i32, message = "btd,bsd->bts"}> : () -> ()
    %cst_21 = arith.constant dense<0.000000e+00> : vector<2x8x8xf32>
    %67 = tpu.matmul %62, %64, %cst_21 {dimension_numbers = #tpu.dot_dimension_numbers<[2], [2], [1], [1], [0, 0, 0, 1, 1, 1], [0], [0]>} : vector<2x8x8xf32>, vector<2x8x8xf32>, vector<2x8x8xf32> -> vector<2x8x8xf32>
    %cst_22 = arith.constant -1.000000e+30 : f32
    "tpu.trace_stop"() : () -> ()
    %68 = vector.shape_cast %5 : vector<8x8xi1> to vector<1x8x8xi1>
    %69 = vector.broadcast %68 : vector<1x8x8xi1> to vector<2x8x8xi1>
    %70 = vector.broadcast %cst_22 : f32 to vector<2x8x8xf32>
    %71 = arith.select %69, %67, %70 : vector<2x8x8xi1>, vector<2x8x8xf32>
    %cst_23 = arith.constant dense<0xFF800000> : vector<2x8xf32>
    %72 = vector.multi_reduction <maximumf>, %71, %cst_23 [2] : vector<2x8x8xf32> to vector<2x8xf32>
    %73 = vector.shape_cast %72 : vector<2x8xf32> to vector<2x8x1xf32>
    %74 = vector.broadcast %73 : vector<2x8x1xf32> to vector<2x8x8xf32>
    %75 = arith.subf %71, %74 : vector<2x8x8xf32>
    %76 = math.exp %75 : vector<2x8x8xf32>
    %cst_24 = arith.constant dense<0.000000e+00> : vector<2x8xf32>
    %77 = vector.multi_reduction <add>, %76, %cst_24 [2] : vector<2x8x8xf32> to vector<2x8xf32>
    %78 = vector.shape_cast %77 : vector<2x8xf32> to vector<2x8x1xf32>
    %cst_25 = arith.constant 1.000000e+00 : f32
    %79 = vector.broadcast %cst_25 : f32 to vector<2x8x1xf32>
    %80 = arith.divf %79, %78 : vector<2x8x1xf32>
    %81 = vector.broadcast %80 : vector<2x8x1xf32> to vector<2x8x8xf32>
    %82 = arith.mulf %76, %81 : vector<2x8x8xf32>
    "tpu.trace_start"() <{level = 10 : i32, message = "bts,bsd->btd"}> : () -> ()
    %cst_26 = arith.constant dense<0.000000e+00> : vector<2x8x8xf32>
    %83 = tpu.matmul %82, %66, %cst_26 {dimension_numbers = #tpu.dot_dimension_numbers<[2], [1], [1], [2], [0, 0, 0, 1, 1, 2], [0], [0]>} : vector<2x8x8xf32>, vector<2x8x8xf32>, vector<2x8x8xf32> -> vector<2x8x8xf32>
    "tpu.trace_stop"() : () -> ()
    %84 = vector.shape_cast %83 : vector<2x8x8xf32> to vector<16x8xf32>
    %c16 = arith.constant 16 : index
    %c0_27 = arith.constant 0 : index
    %85 = vector.load %arg3[%c16, %c0_27] : memref<32x32xf32, #tpu.memory_space<vmem>>, vector<8x32xf32>
    %cst_28 = arith.constant dense<0.000000e+00> : vector<16x32xf32>
    %86 = tpu.matmul %84, %85, %cst_28 {dimension_numbers = #tpu.dot_dimension_numbers<[1], [0], [0], [1], [0, 0, 1, 1], [], []>} : vector<16x8xf32>, vector<8x32xf32>, vector<16x32xf32> -> vector<16x32xf32>
    %87 = arith.addf %60, %86 : vector<16x32xf32>
    %88 = vector.extract_strided_slice %2 {offsets = [0, 24], sizes = [16, 8], strides = [1, 1]} : vector<16x96xf32> to vector<16x8xf32>
    %89 = vector.shape_cast %88 : vector<16x8xf32> to vector<2x8x8xf32>
    %90 = vector.extract_strided_slice %2 {offsets = [0, 56], sizes = [16, 8], strides = [1, 1]} : vector<16x96xf32> to vector<16x8xf32>
    %91 = vector.shape_cast %90 : vector<16x8xf32> to vector<2x8x8xf32>
    %92 = vector.extract_strided_slice %2 {offsets = [0, 88], sizes = [16, 8], strides = [1, 1]} : vector<16x96xf32> to vector<16x8xf32>
    %93 = vector.shape_cast %92 : vector<16x8xf32> to vector<2x8x8xf32>
    "tpu.trace_start"() <{level = 10 : i32, message = "btd,bsd->bts"}> : () -> ()
    %cst_29 = arith.constant dense<0.000000e+00> : vector<2x8x8xf32>
    %94 = tpu.matmul %89, %91, %cst_29 {dimension_numbers = #tpu.dot_dimension_numbers<[2], [2], [1], [1], [0, 0, 0, 1, 1, 1], [0], [0]>} : vector<2x8x8xf32>, vector<2x8x8xf32>, vector<2x8x8xf32> -> vector<2x8x8xf32>
    %cst_30 = arith.constant -1.000000e+30 : f32
    "tpu.trace_stop"() : () -> ()
    %95 = vector.shape_cast %5 : vector<8x8xi1> to vector<1x8x8xi1>
    %96 = vector.broadcast %95 : vector<1x8x8xi1> to vector<2x8x8xi1>
    %97 = vector.broadcast %cst_30 : f32 to vector<2x8x8xf32>
    %98 = arith.select %96, %94, %97 : vector<2x8x8xi1>, vector<2x8x8xf32>
    %cst_31 = arith.constant dense<0xFF800000> : vector<2x8xf32>
    %99 = vector.multi_reduction <maximumf>, %98, %cst_31 [2] : vector<2x8x8xf32> to vector<2x8xf32>
    %100 = vector.shape_cast %99 : vector<2x8xf32> to vector<2x8x1xf32>
    %101 = vector.broadcast %100 : vector<2x8x1xf32> to vector<2x8x8xf32>
    %102 = arith.subf %98, %101 : vector<2x8x8xf32>
    %103 = math.exp %102 : vector<2x8x8xf32>
    %cst_32 = arith.constant dense<0.000000e+00> : vector<2x8xf32>
    %104 = vector.multi_reduction <add>, %103, %cst_32 [2] : vector<2x8x8xf32> to vector<2x8xf32>
    %105 = vector.shape_cast %104 : vector<2x8xf32> to vector<2x8x1xf32>
    %cst_33 = arith.constant 1.000000e+00 : f32
    %106 = vector.broadcast %cst_33 : f32 to vector<2x8x1xf32>
    %107 = arith.divf %106, %105 : vector<2x8x1xf32>
    %108 = vector.broadcast %107 : vector<2x8x1xf32> to vector<2x8x8xf32>
    %109 = arith.mulf %103, %108 : vector<2x8x8xf32>
    "tpu.trace_start"() <{level = 10 : i32, message = "bts,bsd->btd"}> : () -> ()
    %cst_34 = arith.constant dense<0.000000e+00> : vector<2x8x8xf32>
    %110 = tpu.matmul %109, %93, %cst_34 {dimension_numbers = #tpu.dot_dimension_numbers<[2], [1], [1], [2], [0, 0, 0, 1, 1, 2], [0], [0]>} : vector<2x8x8xf32>, vector<2x8x8xf32>, vector<2x8x8xf32> -> vector<2x8x8xf32>
    "tpu.trace_stop"() : () -> ()
    %111 = vector.shape_cast %110 : vector<2x8x8xf32> to vector<16x8xf32>
    %c24 = arith.constant 24 : index
    %c0_35 = arith.constant 0 : index
    %112 = vector.load %arg3[%c24, %c0_35] : memref<32x32xf32, #tpu.memory_space<vmem>>, vector<8x32xf32>
    %cst_36 = arith.constant dense<0.000000e+00> : vector<16x32xf32>
    %113 = tpu.matmul %111, %112, %cst_36 {dimension_numbers = #tpu.dot_dimension_numbers<[1], [0], [0], [1], [0, 0, 1, 1], [], []>} : vector<16x8xf32>, vector<8x32xf32>, vector<16x32xf32> -> vector<16x32xf32>
    %114 = arith.addf %87, %113 : vector<16x32xf32>
    %c0_37 = arith.constant 0 : index
    %c0_38 = arith.constant 0 : index
    %115 = vector.load %arg4[%c0_37, %c0_38] : memref<1x32xf32, #tpu.memory_space<vmem>>, vector<1x32xf32>
    %116 = vector.broadcast %115 : vector<1x32xf32> to vector<16x32xf32>
    %117 = arith.addf %114, %116 : vector<16x32xf32>
    %c0_39 = arith.constant 0 : index
    %c0_40 = arith.constant 0 : index
    %118 = vector.load %arg5[%c0_39, %c0_40] : memref<16x32xf32, #tpu.memory_space<vmem>>, vector<16x32xf32>
    tpu.vector_store %arg5[%c0_39, %c0_40], %117 {strides = array<i32>} : memref<16x32xf32, #tpu.memory_space<vmem>>, vector<16x32xf32>,
    return
  }
  func.func @transform_0(%arg0: i32) -> (i32, i32) {
    %c0_i32 = arith.constant 0 : i32
    %c0_i32_0 = arith.constant 0 : i32
    return %arg0, %c0_i32 : i32, i32
  }
  func.func @transform_1(%arg0: i32) -> (i32, i32) {
    %c0_i32 = arith.constant 0 : i32
    %c0_i32_0 = arith.constant 0 : i32
    %c0_i32_1 = arith.constant 0 : i32
    return %c0_i32, %c0_i32_0 : i32, i32
  }
  func.func @transform_2(%arg0: i32) -> (i32, i32) {
    %c0_i32 = arith.constant 0 : i32
    %c0_i32_0 = arith.constant 0 : i32
    %c0_i32_1 = arith.constant 0 : i32
    return %c0_i32, %c0_i32_0 : i32, i32
  }
  func.func @transform_3(%arg0: i32) -> (i32, i32) {
    %c0_i32 = arith.constant 0 : i32
    %c0_i32_0 = arith.constant 0 : i32
    %c0_i32_1 = arith.constant 0 : i32
    return %c0_i32, %c0_i32_0 : i32, i32
  }
  func.func @transform_4(%arg0: i32) -> (i32, i32) {
    %c0_i32 = arith.constant 0 : i32
    %c0_i32_0 = arith.constant 0 : i32
    return %arg0, %c0_i32 : i32, i32
  }
}

</mosaic_0001>

<llo_original>
// kernel: multi_head_attention.1
$region0: #{multi_head_attention.1}
  #allocation0 [shape = 'u32[]', space=smem, size = 0x4, offset = 0x4, fixed_abs, tag = 'smem constant byte address 0x4 - core index']
  #allocation1 [shape = 'u32[72,128]{1,0:T(1,128)}', space=vmem, size = 0x9000, scoped, tag = 'internal scratch']
  %s0 = inlined_call_operand.vmem [shape: f32[16,32], index: 0, kind: input, shape index: {}]
  %s1 = inlined_call_operand.vmem [shape: f32[32,96], index: 1, kind: input, shape index: {}]
  %s2 = inlined_call_operand.vmem [shape: f32[32,32], index: 2, kind: input, shape index: {}]
  %s3 = inlined_call_operand.vmem [shape: f32[1,32], index: 3, kind: input, shape index: {}]
  %s4 = inlined_call_operand.hbm [shape: f32[16,32], index: 4, kind: output, shape index: {}]
  %s5 = sld [smem:[#allocation0]]
  $region26: #{multi_head_attention.1} parent=0
    _
  %s7 = ssub.s32 1, %s5
  %s8 = scalar_select 0, %s7, %s5
  $region1: #{multi_head_attention.1} parent=0
    #allocation2 [shape = 'u8[8192]{0}', space=vmem, size = 0x2000, scoped, tag = 'output window, operand 0, single buffered']
    #allocation3 [shape = 's32[1]{0}', space=sflag, size = 0x4, scoped, tag = 'scoped memory for multi_head_attention.1']
    %9 = vsyncpa [#allocation3], 0
    // Predicated region
    $region2: #{multi_head_attention.1} parent=1 // pred_check
      _
    $region3: #{multi_head_attention.1} parent=1 // pred_check_branch
      %11 = sbr.rel (0) target = $region5
    $region4: #{multi_head_attention.1} parent=1 // pred_region
      _
    $region5: #{multi_head_attention.1} parent=1 // pred_fallthru
      _
    // Predicated region
    $region6: #{multi_head_attention.1} parent=1 // pred_check
      _
    $region7: #{multi_head_attention.1} parent=1 // pred_check_branch
      %13 = sbr.rel (0) target = $region9
    $region8: #{multi_head_attention.1} parent=1 // pred_region
      _
    $region9: #{multi_head_attention.1} parent=1 // pred_fallthru
      _
    // Predicated region
    $region10: #{multi_head_attention.1} parent=1 // pred_check
      _
    $region11: #{multi_head_attention.1} parent=1 // pred_check_branch
      %15 = sbr.rel (0) target = $region13
    $region12: #{multi_head_attention.1} parent=1 // pred_region
      _
    $region13: #{multi_head_attention.1} parent=1 // pred_fallthru
      _
    // Predicated region
    $region14: #{multi_head_attention.1} parent=1 // pred_check
      _
    $region15: #{multi_head_attention.1} parent=1 // pred_check_branch
      %17 = sbr.rel (0) target = $region17
    $region16: #{multi_head_attention.1} parent=1 // pred_region
      _
    $region17: #{multi_head_attention.1} parent=1 // pred_fallthru
      _
    %v18 = vld [vmem:[%s0] sm:$0xff]
    %v19 = vld [vmem:[%s0 + $0x8] sm:$0xff]
    %v20 = vld [vmem:[%s1] sm:$0xff]
    %v21 = vld [vmem:[%s1 + $0x8] sm:$0xff]
    %v22 = vld [vmem:[%s1 + $0x10] sm:$0xff]
    %v23 = vld [vmem:[%s1 + $0x18] sm:$0xff]
    %vm24 = vcmask 261120
    %v26 = vsel %vm24, %v18, 0
    %v29 = vsel %vm24, %v19, 0
    %31 = vmatpush.msra.mxu0 0.0
    %32 = vmatpush.msra.mxu0 0.0
    %33 = vmatpush.msra.mxu0 0.0
    %34 = vmatpush.msra.mxu0 0.0
    %35 = vmatpush.msra.mxu0 0.0
    %36 = vmatpush.msra.mxu0 0.0
    %37 = vmatpush.msra.mxu0 0.0
    %38 = vmatpush.msra.mxu0 0.0
    %39 = vmatpush.msra.mxu0 0.0
    %40 = vmatpush.msra.mxu0 0.0
    %41 = vmatpush.msra.mxu0 0.0
    %42 = vmatpush.msra.mxu0 0.0
    %43 = vmatpush.msra.mxu0 %v23
    %44 = vmatpush.msra.mxu0 %v22
    %45 = vmatpush.msra.mxu0 %v21
    %46 = vmatpush.msra.mxu0 %v20
    %47 = vmatmul.f32.gmra.mxu0 %v26
    %v48 = vpop.f32.mrf.mxu0
    %v49 = vadd.f32 0.0, %v48
    %50 = vmatmul.f32.gmra.mxu0 %v29
    %v51 = vpop.f32.mrf.mxu0
    %v52 = vadd.f32 0.0, %v51
    %53 = vdwg.mxu0
    %v54 = vlaneseq
    %v55 = vshrl.u32 %v54, 7
    %v56 = vlaneseq
    %v57 = vand.u32 %v56, 127
    %vm58 = vcmp.le.s32.totalorder %v57, %v55
    %60 = vrot.lane.b32.xlu0 %v49, 96
    %v61 = vpop.permute.xlu0 %60
    %vm62 = vcmask 64512
    %v63 = vsel %vm62, %v49, 0
    %v65 = vsel %vm62, %v61, 0
    %67 = vmatpush.xpose.msra.mxu0 0.0
    %68 = vmatpush.xpose.msra.mxu0 0.0
    %69 = vmatpush.xpose.msra.mxu0 0.0
    %70 = vmatpush.xpose.msra.mxu0 0.0
    %71 = vmatpush.xpose.msra.mxu0 0.0
    %72 = vmatpush.xpose.msra.mxu0 0.0
    %73 = vmatpush.xpose.msra.mxu0 0.0
    %74 = vmatpush.xpose.msra.mxu0 0.0
    %75 = vmatpush.xpose.msra.mxu0 0.0
    %76 = vmatpush.xpose.msra.mxu0 0.0
    %77 = vmatpush.xpose.msra.mxu0 0.0
    %78 = vmatpush.xpose.msra.mxu0 0.0
    %79 = vmatpush.xpose.msra.mxu0 0.0
    %80 = vmatpush.xpose.msra.mxu0 0.0
    %81 = vmatpush.xpose.msra.mxu0 0.0
    %82 = vmatpush.xpose.msra.mxu0 %v65
    %83 = vmatmul.f32.gmra.mxu0 %v63
    %v84 = vpop.f32.mrf.mxu0
    %v85 = vadd.f32 0.0, %v84
    %86 = vdwg.mxu0
    %88 = vrot.lane.b32.xlu0 %v52, 96
    %v89 = vpop.permute.xlu0 %88
    %v90 = vsel %vm62, %v52, 0
    %v92 = vsel %vm62, %v89, 0
    %94 = vmatpush.xpose.msra.mxu0 0.0
    %95 = vmatpush.xpose.msra.mxu0 0.0
    %96 = vmatpush.xpose.msra.mxu0 0.0
    %97 = vmatpush.xpose.msra.mxu0 0.0
    %98 = vmatpush.xpose.msra.mxu0 0.0
    %99 = vmatpush.xpose.msra.mxu0 0.0
    %100 = vmatpush.xpose.msra.mxu0 0.0
    %101 = vmatpush.xpose.msra.mxu0 0.0
    %102 = vmatpush.xpose.msra.mxu0 0.0
    %103 = vmatpush.xpose.msra.mxu0 0.0
    %104 = vmatpush.xpose.msra.mxu0 0.0
    %105 = vmatpush.xpose.msra.mxu0 0.0
    %106 = vmatpush.xpose.msra.mxu0 0.0
    %107 = vmatpush.xpose.msra.mxu0 0.0
    %108 = vmatpush.xpose.msra.mxu0 0.0
    %109 = vmatpush.xpose.msra.mxu0 %v92
    %110 = vmatmul.f32.gmra.mxu0 %v90
    %v111 = vpop.f32.mrf.mxu0
    %v112 = vadd.f32 0.0, %v111
    %113 = vdwg.mxu0
    %v114 = vsel %vm58, 1, 0
    %vm115 = vcmp.eq.s32.totalorder %v114, 1
    %v116 = vsel %vm115, %v85, -1e+30
    %v117 = vsel %vm115, %v112, -1e+30
    %v118 = vsel %vm62, %v116, -inf
    %119 = vmax.xlane.f32.xlu0 %v118
    %v120 = vpop.xlane.xlu0 %119
    %v121 = vsel %vm62, %v117, -inf
    %122 = vmax.xlane.f32.xlu0 %v121
    %v123 = vpop.xlane.xlu0 %122
    %v124 = vsub.f32 %v116, %v120
    %v125 = vsub.f32 %v117, %v123
    %v126 = vmul.f32 %v124, 1.442695
    %v127 = vpow.pop %v126
    %v128 = vmul.f32 %v125, 1.442695
    %v129 = vpow.pop %v128
    %v130 = vsel %vm62, %v127, 0.0
    %131 = vadd.xlane.f32.xlu0 %v130
    %v132 = vpop.xlane.xlu0 %131
    %v133 = vsel %vm62, %v129, 0.0
    %134 = vadd.xlane.f32.xlu0 %v133
    %v135 = vpop.xlane.xlu0 %134
    %v136 = vrcp.pop %v132
    %v137 = vmul.f32 %v132, %v136
    %v138 = vsub.f32 1.0, %v137
    %v139 = vmul.f32 %v136, %v138
    %v140 = vadd.f32 %v136, %v139
    %vm141 = vweird.f32 %v132
    %vm142 = vweird.f32 %v136
    %vm143 = vmor %vm141, %vm142
    %v144 = vsel %vm143, %v136, %v140
    %v145 = vand.u32 2147483647, %v132
    %vm146 = vcmp.eq.f32.partialorder %v145, 8.507059e+37
    %v147 = vand.u32 %v132, 2147483648
    %v148 = vor.u32 1.1754944e-38, %v147
    %v149 = vsel %vm146, %v148, %v144
    %v150 = vmul.f32 1.0, %v149
    %v151 = vrcp.pop %v135
    %v152 = vmul.f32 %v135, %v151
    %v153 = vsub.f32 1.0, %v152
    %v154 = vmul.f32 %v151, %v153
    %v155 = vadd.f32 %v151, %v154
    %vm156 = vweird.f32 %v135
    %vm157 = vweird.f32 %v151
    %vm158 = vmor %vm156, %vm157
    %v159 = vsel %vm158, %v151, %v155
    %v160 = vand.u32 2147483647, %v135
    %vm161 = vcmp.eq.f32.partialorder %v160, 8.507059e+37
    %v162 = vand.u32 %v135, 2147483648
    %v163 = vor.u32 1.1754944e-38, %v162
    %v164 = vsel %vm161, %v163, %v159
    %v165 = vmul.f32 1.0, %v164
    %v166 = vmul.f32 %v127, %v150
    %v167 = vmul.f32 %v129, %v165
    %168 = vrot.lane.b32.xlu0 %v49, 64
    %v169 = vpop.permute.xlu0 %168
    %v172 = vsel %vm62, %v166, 0
    %174 = vmatpush.msra.mxu0 0.0
    %175 = vmatpush.msra.mxu0 0.0
    %176 = vmatpush.msra.mxu0 0.0
    %177 = vmatpush.msra.mxu0 0.0
    %178 = vmatpush.msra.mxu0 0.0
    %179 = vmatpush.msra.mxu0 0.0
    %180 = vmatpush.msra.mxu0 0.0
    %181 = vmatpush.msra.mxu0 0.0
    %182 = vmatpush.msra.mxu0 0.0
    %183 = vmatpush.msra.mxu0 0.0
    %184 = vmatpush.msra.mxu0 0.0
    %185 = vmatpush.msra.mxu0 0.0
    %186 = vmatpush.msra.mxu0 0.0
    %187 = vmatpush.msra.mxu0 0.0
    %188 = vmatpush.msra.mxu0 0.0
    %189 = vmatpush.msra.mxu0 %v169
    %190 = vmatmul.f32.gmra.mxu0 %v172
    %v191 = vpop.f32.mrf.mxu0
    %v192 = vadd.f32 0.0, %v191
    %193 = vdwg.mxu0
    %194 = vrot.lane.b32.xlu0 %v52, 64
    %v195 = vpop.permute.xlu0 %194
    %v198 = vsel %vm62, %v167, 0
    %200 = vmatpush.msra.mxu0 0.0
    %201 = vmatpush.msra.mxu0 0.0
    %202 = vmatpush.msra.mxu0 0.0
    %203 = vmatpush.msra.mxu0 0.0
    %204 = vmatpush.msra.mxu0 0.0
    %205 = vmatpush.msra.mxu0 0.0
    %206 = vmatpush.msra.mxu0 0.0
    %207 = vmatpush.msra.mxu0 0.0
    %208 = vmatpush.msra.mxu0 0.0
    %209 = vmatpush.msra.mxu0 0.0
    %210 = vmatpush.msra.mxu0 0.0
    %211 = vmatpush.msra.mxu0 0.0
    %212 = vmatpush.msra.mxu0 0.0
    %213 = vmatpush.msra.mxu0 0.0
    %214 = vmatpush.msra.mxu0 0.0
    %215 = vmatpush.msra.mxu0 %v195
    %216 = vmatmul.f32.gmra.mxu0 %v198
    %v217 = vpop.f32.mrf.mxu0
    %v218 = vadd.f32 0.0, %v217
    %219 = vdwg.mxu0
    %v220 = vld [vmem:[%s2] sm:$0xff]
    %221 = vrot.lane.b32.xlu0 %v49, 120
    %v222 = vpop.permute.xlu0 %221
    %223 = vrot.lane.b32.xlu0 %v49, 88
    %v224 = vpop.permute.xlu0 %223
    %v225 = vsel %vm62, %v222, 0
    %v227 = vsel %vm62, %v224, 0
    %229 = vmatpush.xpose.msra.mxu0 0.0
    %230 = vmatpush.xpose.msra.mxu0 0.0
    %231 = vmatpush.xpose.msra.mxu0 0.0
    %232 = vmatpush.xpose.msra.mxu0 0.0
    %233 = vmatpush.xpose.msra.mxu0 0.0
    %234 = vmatpush.xpose.msra.mxu0 0.0
    %235 = vmatpush.xpose.msra.mxu0 0.0
    %236 = vmatpush.xpose.msra.mxu0 0.0
    %237 = vmatpush.xpose.msra.mxu0 0.0
    %238 = vmatpush.xpose.msra.mxu0 0.0
    %239 = vmatpush.xpose.msra.mxu0 0.0
    %240 = vmatpush.xpose.msra.mxu0 0.0
    %241 = vmatpush.xpose.msra.mxu0 0.0
    %242 = vmatpush.xpose.msra.mxu0 0.0
    %243 = vmatpush.xpose.msra.mxu0 0.0
    %244 = vmatpush.xpose.msra.mxu0 %v227
    %245 = vmatmul.f32.gmra.mxu0 %v225
    %v246 = vpop.f32.mrf.mxu0
    %v247 = vadd.f32 0.0, %v246
    %248 = vdwg.mxu0
    %249 = vrot.lane.b32.xlu0 %v52, 120
    %v250 = vpop.permute.xlu0 %249
    %251 = vrot.lane.b32.xlu0 %v52, 88
    %v252 = vpop.permute.xlu0 %251
    %v253 = vsel %vm62, %v250, 0
    %v255 = vsel %vm62, %v252, 0
    %257 = vmatpush.xpose.msra.mxu0 0.0
    %258 = vmatpush.xpose.msra.mxu0 0.0
    %259 = vmatpush.xpose.msra.mxu0 0.0
    %260 = vmatpush.xpose.msra.mxu0 0.0
    %261 = vmatpush.xpose.msra.mxu0 0.0
    %262 = vmatpush.xpose.msra.mxu0 0.0
    %263 = vmatpush.xpose.msra.mxu0 0.0
    %264 = vmatpush.xpose.msra.mxu0 0.0
    %265 = vmatpush.xpose.msra.mxu0 0.0
    %266 = vmatpush.xpose.msra.mxu0 0.0
    %267 = vmatpush.xpose.msra.mxu0 0.0
    %268 = vmatpush.xpose.msra.mxu0 0.0
    %269 = vmatpush.xpose.msra.mxu0 0.0
    %270 = vmatpush.xpose.msra.mxu0 0.0
    %271 = vmatpush.xpose.msra.mxu0 0.0
    %272 = vmatpush.xpose.msra.mxu0 %v255
    %273 = vmatmul.f32.gmra.mxu0 %v253
    %v274 = vpop.f32.mrf.mxu0
    %v275 = vadd.f32 0.0, %v274
    %276 = vdwg.mxu0
    %v277 = vsel %vm115, %v247, -1e+30
    %v278 = vsel %vm115, %v275, -1e+30
    %v279 = vsel %vm62, %v277, -inf
    %280 = vmax.xlane.f32.xlu0 %v279
    %v281 = vpop.xlane.xlu0 %280
    %v282 = vsel %vm62, %v278, -inf
    %283 = vmax.xlane.f32.xlu0 %v282
    %v284 = vpop.xlane.xlu0 %283
    %v285 = vsub.f32 %v277, %v281
    %v286 = vsub.f32 %v278, %v284
    %v287 = vmul.f32 %v285, 1.442695
    %v288 = vpow.pop %v287
    %v289 = vmul.f32 %v286, 1.442695
    %v290 = vpow.pop %v289
    %v291 = vsel %vm62, %v288, 0.0
    %292 = vadd.xlane.f32.xlu0 %v291
    %v293 = vpop.xlane.xlu0 %292
    %v294 = vsel %vm62, %v290, 0.0
    %295 = vadd.xlane.f32.xlu0 %v294
    %v296 = vpop.xlane.xlu0 %295
    %v297 = vrcp.pop %v293
    %v298 = vmul.f32 %v293, %v297
    %v299 = vsub.f32 1.0, %v298
    %v300 = vmul.f32 %v297, %v299
    %v301 = vadd.f32 %v297, %v300
    %vm302 = vweird.f32 %v293
    %vm303 = vweird.f32 %v297
    %vm304 = vmor %vm302, %vm303
    %v305 = vsel %vm304, %v297, %v301
    %v306 = vand.u32 2147483647, %v293
    %vm307 = vcmp.eq.f32.partialorder %v306, 8.507059e+37
    %v308 = vand.u32 %v293, 2147483648
    %v309 = vor.u32 1.1754944e-38, %v308
    %v310 = vsel %vm307, %v309, %v305
    %v311 = vmul.f32 1.0, %v310
    %v312 = vrcp.pop %v296
    %v313 = vmul.f32 %v296, %v312
    %v314 = vsub.f32 1.0, %v313
    %v315 = vmul.f32 %v312, %v314
    %v316 = vadd.f32 %v312, %v315
    %vm317 = vweird.f32 %v296
    %vm318 = vweird.f32 %v312
    %vm319 = vmor %vm317, %vm318
    %v320 = vsel %vm319, %v312, %v316
    %v321 = vand.u32 2147483647, %v296
    %vm322 = vcmp.eq.f32.partialorder %v321, 8.507059e+37
    %v323 = vand.u32 %v296, 2147483648
    %v324 = vor.u32 1.1754944e-38, %v323
    %v325 = vsel %vm322, %v324, %v320
    %v326 = vmul.f32 1.0, %v325
    %v327 = vmul.f32 %v288, %v311
    %v328 = vmul.f32 %v290, %v326
    %329 = vrot.lane.b32.xlu0 %v49, 56
    %v330 = vpop.permute.xlu0 %329
    %v333 = vsel %vm62, %v327, 0
    %335 = vmatpush.msra.mxu0 0.0
    %336 = vmatpush.msra.mxu0 0.0
    %337 = vmatpush.msra.mxu0 0.0
    %338 = vmatpush.msra.mxu0 0.0
    %339 = vmatpush.msra.mxu0 0.0
    %340 = vmatpush.msra.mxu0 0.0
    %341 = vmatpush.msra.mxu0 0.0
    %342 = vmatpush.msra.mxu0 0.0
    %343 = vmatpush.msra.mxu0 0.0
    %344 = vmatpush.msra.mxu0 0.0
    %345 = vmatpush.msra.mxu0 0.0
    %346 = vmatpush.msra.mxu0 0.0
    %347 = vmatpush.msra.mxu0 0.0
    %348 = vmatpush.msra.mxu0 0.0
    %349 = vmatpush.msra.mxu0 0.0
    %350 = vmatpush.msra.mxu0 %v330
    %351 = vmatmul.f32.gmra.mxu0 %v333
    %v352 = vpop.f32.mrf.mxu0
    %v353 = vadd.f32 0.0, %v352
    %354 = vdwg.mxu0
    %355 = vrot.lane.b32.xlu0 %v52, 56
    %v356 = vpop.permute.xlu0 %355
    %v359 = vsel %vm62, %v328, 0
    %361 = vmatpush.msra.mxu0 0.0
    %362 = vmatpush.msra.mxu0 0.0
    %363 = vmatpush.msra.mxu0 0.0
    %364 = vmatpush.msra.mxu0 0.0
    %365 = vmatpush.msra.mxu0 0.0
    %366 = vmatpush.msra.mxu0 0.0
    %367 = vmatpush.msra.mxu0 0.0
    %368 = vmatpush.msra.mxu0 0.0
    %369 = vmatpush.msra.mxu0 0.0
    %370 = vmatpush.msra.mxu0 0.0
    %371 = vmatpush.msra.mxu0 0.0
    %372 = vmatpush.msra.mxu0 0.0
    %373 = vmatpush.msra.mxu0 0.0
    %374 = vmatpush.msra.mxu0 0.0
    %375 = vmatpush.msra.mxu0 0.0
    %376 = vmatpush.msra.mxu0 %v356
    %377 = vmatmul.f32.gmra.mxu0 %v359
    %v378 = vpop.f32.mrf.mxu0
    %v379 = vadd.f32 0.0, %v378
    %380 = vdwg.mxu0
    %v381 = vld [vmem:[%s2 + $0x8] sm:$0xff]
    %v383 = vsel %vm62, %v353, 0
    %v386 = vsel %vm62, %v379, 0
    %388 = vmatpush.msra.mxu0 0.0
    %389 = vmatpush.msra.mxu0 0.0
    %390 = vmatpush.msra.mxu0 0.0
    %391 = vmatpush.msra.mxu0 0.0
    %392 = vmatpush.msra.mxu0 0.0
    %393 = vmatpush.msra.mxu0 0.0
    %394 = vmatpush.msra.mxu0 0.0
    %395 = vmatpush.msra.mxu0 0.0
    %396 = vmatpush.msra.mxu0 0.0
    %397 = vmatpush.msra.mxu0 0.0
    %398 = vmatpush.msra.mxu0 0.0
    %399 = vmatpush.msra.mxu0 0.0
    %400 = vmatpush.msra.mxu0 0.0
    %401 = vmatpush.msra.mxu0 0.0
    %402 = vmatpush.msra.mxu0 0.0
    %403 = vmatpush.msra.mxu0 %v381
    %404 = vmatmul.f32.gmra.mxu0 %v383
    %v405 = vpop.f32.mrf.mxu0
    %v406 = vadd.f32 0.0, %v405
    %407 = vmatmul.f32.gmra.mxu0 %v386
    %v408 = vpop.f32.mrf.mxu0
    %v409 = vadd.f32 0.0, %v408
    %410 = vdwg.mxu0
    %v412 = vsel %vm62, %v192, 0
    %v415 = vsel %vm62, %v218, 0
    %417 = vmatpush.msra.mxu0 0.0
    %418 = vmatpush.msra.mxu0 0.0
    %419 = vmatpush.msra.mxu0 0.0
    %420 = vmatpush.msra.mxu0 0.0
    %421 = vmatpush.msra.mxu0 0.0
    %422 = vmatpush.msra.mxu0 0.0
    %423 = vmatpush.msra.mxu0 0.0
    %424 = vmatpush.msra.mxu0 0.0
    %425 = vmatpush.msra.mxu0 0.0
    %426 = vmatpush.msra.mxu0 0.0
    %427 = vmatpush.msra.mxu0 0.0
    %428 = vmatpush.msra.mxu0 0.0
    %429 = vmatpush.msra.mxu0 0.0
    %430 = vmatpush.msra.mxu0 0.0
    %431 = vmatpush.msra.mxu0 0.0
    %432 = vmatpush.msra.mxu0 %v220
    %433 = vmatmul.f32.gmra.mxu0 %v412
    %v434 = vpop.f32.mrf.mxu0
    %v435 = vadd.f32 %v406, %v434
    %436 = vmatmul.f32.gmra.mxu0 %v415
    %v437 = vpop.f32.mrf.mxu0
    %v438 = vadd.f32 %v409, %v437
    %439 = vdwg.mxu0
    %440 = vrot.lane.b32.xlu0 %v49, 112
    %v441 = vpop.permute.xlu0 %440
    %442 = vrot.lane.b32.xlu0 %v49, 80
    %v443 = vpop.permute.xlu0 %442
    %v444 = vsel %vm62, %v441, 0
    %v446 = vsel %vm62, %v443, 0
    %448 = vmatpush.xpose.msra.mxu0 0.0
    %449 = vmatpush.xpose.msra.mxu0 0.0
    %450 = vmatpush.xpose.msra.mxu0 0.0
    %451 = vmatpush.xpose.msra.mxu0 0.0
    %452 = vmatpush.xpose.msra.mxu0 0.0
    %453 = vmatpush.xpose.msra.mxu0 0.0
    %454 = vmatpush.xpose.msra.mxu0 0.0
    %455 = vmatpush.xpose.msra.mxu0 0.0
    %456 = vmatpush.xpose.msra.mxu0 0.0
    %457 = vmatpush.xpose.msra.mxu0 0.0
    %458 = vmatpush.xpose.msra.mxu0 0.0
    %459 = vmatpush.xpose.msra.mxu0 0.0
    %460 = vmatpush.xpose.msra.mxu0 0.0
    %461 = vmatpush.xpose.msra.mxu0 0.0
    %462 = vmatpush.xpose.msra.mxu0 0.0
    %463 = vmatpush.xpose.msra.mxu0 %v446
    %464 = vmatmul.f32.gmra.mxu0 %v444
    %v465 = vpop.f32.mrf.mxu0
    %v466 = vadd.f32 0.0, %v465
    %467 = vdwg.mxu0
    %468 = vrot.lane.b32.xlu0 %v52, 112
    %v469 = vpop.permute.xlu0 %468
    %470 = vrot.lane.b32.xlu0 %v52, 80
    %v471 = vpop.permute.xlu0 %470
    %v472 = vsel %vm62, %v469, 0
    %v474 = vsel %vm62, %v471, 0
    %476 = vmatpush.xpose.msra.mxu0 0.0
    %477 = vmatpush.xpose.msra.mxu0 0.0
    %478 = vmatpush.xpose.msra.mxu0 0.0
    %479 = vmatpush.xpose.msra.mxu0 0.0
    %480 = vmatpush.xpose.msra.mxu0 0.0
    %481 = vmatpush.xpose.msra.mxu0 0.0
    %482 = vmatpush.xpose.msra.mxu0 0.0
    %483 = vmatpush.xpose.msra.mxu0 0.0
    %484 = vmatpush.xpose.msra.mxu0 0.0
    %485 = vmatpush.xpose.msra.mxu0 0.0
    %486 = vmatpush.xpose.msra.mxu0 0.0
    %487 = vmatpush.xpose.msra.mxu0 0.0
    %488 = vmatpush.xpose.msra.mxu0 0.0
    %489 = vmatpush.xpose.msra.mxu0 0.0
    %490 = vmatpush.xpose.msra.mxu0 0.0
    %491 = vmatpush.xpose.msra.mxu0 %v474
    %492 = vmatmul.f32.gmra.mxu0 %v472
    %v493 = vpop.f32.mrf.mxu0
    %v494 = vadd.f32 0.0, %v493
    %495 = vdwg.mxu0
    %v496 = vsel %vm115, %v466, -1e+30
    %v497 = vsel %vm115, %v494, -1e+30
    %v498 = vsel %vm62, %v496, -inf
    %499 = vmax.xlane.f32.xlu0 %v498
    %v500 = vpop.xlane.xlu0 %499
    %v501 = vsel %vm62, %v497, -inf
    %502 = vmax.xlane.f32.xlu0 %v501
    %v503 = vpop.xlane.xlu0 %502
    %v504 = vsub.f32 %v496, %v500
    %v505 = vsub.f32 %v497, %v503
    %v506 = vmul.f32 %v504, 1.442695
    %v507 = vpow.pop %v506
    %v508 = vmul.f32 %v505, 1.442695
    %v509 = vpow.pop %v508
    %v510 = vsel %vm62, %v507, 0.0
    %511 = vadd.xlane.f32.xlu0 %v510
    %v512 = vpop.xlane.xlu0 %511
    %v513 = vsel %vm62, %v509, 0.0
    %514 = vadd.xlane.f32.xlu0 %v513
    %v515 = vpop.xlane.xlu0 %514
    %v516 = vrcp.pop %v512
    %v517 = vmul.f32 %v512, %v516
    %v518 = vsub.f32 1.0, %v517
    %v519 = vmul.f32 %v516, %v518
    %v520 = vadd.f32 %v516, %v519
    %vm521 = vweird.f32 %v512
    %vm522 = vweird.f32 %v516
    %vm523 = vmor %vm521, %vm522
    %v524 = vsel %vm523, %v516, %v520
    %v525 = vand.u32 2147483647, %v512
    %vm526 = vcmp.eq.f32.partialorder %v525, 8.507059e+37
    %v527 = vand.u32 %v512, 2147483648
    %v528 = vor.u32 1.1754944e-38, %v527
    %v529 = vsel %vm526, %v528, %v524
    %v530 = vmul.f32 1.0, %v529
    %v531 = vrcp.pop %v515
    %v532 = vmul.f32 %v515, %v531
    %v533 = vsub.f32 1.0, %v532
    %v534 = vmul.f32 %v531, %v533
    %v535 = vadd.f32 %v531, %v534
    %vm536 = vweird.f32 %v515
    %vm537 = vweird.f32 %v531
    %vm538 = vmor %vm536, %vm537
    %v539 = vsel %vm538, %v531, %v535
    %v540 = vand.u32 2147483647, %v515
    %vm541 = vcmp.eq.f32.partialorder %v540, 8.507059e+37
    %v542 = vand.u32 %v515, 2147483648
    %v543 = vor.u32 1.1754944e-38, %v542
    %v544 = vsel %vm541, %v543, %v539
    %v545 = vmul.f32 1.0, %v544
    %v546 = vmul.f32 %v507, %v530
    %v547 = vmul.f32 %v509, %v545
    %548 = vrot.lane.b32.xlu0 %v49, 48
    %v549 = vpop.permute.xlu0 %548
    %v552 = vsel %vm62, %v546, 0
    %554 = vmatpush.msra.mxu0 0.0
    %555 = vmatpush.msra.mxu0 0.0
    %556 = vmatpush.msra.mxu0 0.0
    %557 = vmatpush.msra.mxu0 0.0
    %558 = vmatpush.msra.mxu0 0.0
    %559 = vmatpush.msra.mxu0 0.0
    %560 = vmatpush.msra.mxu0 0.0
    %561 = vmatpush.msra.mxu0 0.0
    %562 = vmatpush.msra.mxu0 0.0
    %563 = vmatpush.msra.mxu0 0.0
    %564 = vmatpush.msra.mxu0 0.0
    %565 = vmatpush.msra.mxu0 0.0
    %566 = vmatpush.msra.mxu0 0.0
    %567 = vmatpush.msra.mxu0 0.0
    %568 = vmatpush.msra.mxu0 0.0
    %569 = vmatpush.msra.mxu0 %v549
    %570 = vmatmul.f32.gmra.mxu0 %v552
    %v571 = vpop.f32.mrf.mxu0
    %v572 = vadd.f32 0.0, %v571
    %573 = vdwg.mxu0
    %574 = vrot.lane.b32.xlu0 %v52, 48
    %v575 = vpop.permute.xlu0 %574
    %v578 = vsel %vm62, %v547, 0
    %580 = vmatpush.msra.mxu0 0.0
    %581 = vmatpush.msra.mxu0 0.0
    %582 = vmatpush.msra.mxu0 0.0
    %583 = vmatpush.msra.mxu0 0.0
    %584 = vmatpush.msra.mxu0 0.0
    %585 = vmatpush.msra.mxu0 0.0
    %586 = vmatpush.msra.mxu0 0.0
    %587 = vmatpush.msra.mxu0 0.0
    %588 = vmatpush.msra.mxu0 0.0
    %589 = vmatpush.msra.mxu0 0.0
    %590 = vmatpush.msra.mxu0 0.0
    %591 = vmatpush.msra.mxu0 0.0
    %592 = vmatpush.msra.mxu0 0.0
    %593 = vmatpush.msra.mxu0 0.0
    %594 = vmatpush.msra.mxu0 0.0
    %595 = vmatpush.msra.mxu0 %v575
    %596 = vmatmul.f32.gmra.mxu0 %v578
    %v597 = vpop.f32.mrf.mxu0
    %v598 = vadd.f32 0.0, %v597
    %599 = vdwg.mxu0
    %v600 = vld [vmem:[%s2 + $0x10] sm:$0xff]
    %v602 = vsel %vm62, %v572, 0
    %v605 = vsel %vm62, %v598, 0
    %607 = vmatpush.msra.mxu0 0.0
    %608 = vmatpush.msra.mxu0 0.0
    %609 = vmatpush.msra.mxu0 0.0
    %610 = vmatpush.msra.mxu0 0.0
    %611 = vmatpush.msra.mxu0 0.0
    %612 = vmatpush.msra.mxu0 0.0
    %613 = vmatpush.msra.mxu0 0.0
    %614 = vmatpush.msra.mxu0 0.0
    %615 = vmatpush.msra.mxu0 0.0
    %616 = vmatpush.msra.mxu0 0.0
    %617 = vmatpush.msra.mxu0 0.0
    %618 = vmatpush.msra.mxu0 0.0
    %619 = vmatpush.msra.mxu0 0.0
    %620 = vmatpush.msra.mxu0 0.0
    %621 = vmatpush.msra.mxu0 0.0
    %622 = vmatpush.msra.mxu0 %v600
    %623 = vmatmul.f32.gmra.mxu0 %v602
    %v624 = vpop.f32.mrf.mxu0
    %v625 = vadd.f32 0.0, %v624
    %626 = vmatmul.f32.gmra.mxu0 %v605
    %v627 = vpop.f32.mrf.mxu0
    %v628 = vadd.f32 0.0, %v627
    %629 = vdwg.mxu0
    %v630 = vadd.f32 %v435, %v625
    %v631 = vadd.f32 %v438, %v628
    %632 = vrot.lane.b32.xlu0 %v49, 104
    %v633 = vpop.permute.xlu0 %632
    %634 = vrot.lane.b32.xlu0 %v49, 72
    %v635 = vpop.permute.xlu0 %634
    %v636 = vsel %vm62, %v633, 0
    %v638 = vsel %vm62, %v635, 0
    %640 = vmatpush.xpose.msra.mxu0 0.0
    %641 = vmatpush.xpose.msra.mxu0 0.0
    %642 = vmatpush.xpose.msra.mxu0 0.0
    %643 = vmatpush.xpose.msra.mxu0 0.0
    %644 = vmatpush.xpose.msra.mxu0 0.0
    %645 = vmatpush.xpose.msra.mxu0 0.0
    %646 = vmatpush.xpose.msra.mxu0 0.0
    %647 = vmatpush.xpose.msra.mxu0 0.0
    %648 = vmatpush.xpose.msra.mxu0 0.0
    %649 = vmatpush.xpose.msra.mxu0 0.0
    %650 = vmatpush.xpose.msra.mxu0 0.0
    %651 = vmatpush.xpose.msra.mxu0 0.0
    %652 = vmatpush.xpose.msra.mxu0 0.0
    %653 = vmatpush.xpose.msra.mxu0 0.0
    %654 = vmatpush.xpose.msra.mxu0 0.0
    %655 = vmatpush.xpose.msra.mxu0 %v638
    %656 = vmatmul.f32.gmra.mxu0 %v636
    %v657 = vpop.f32.mrf.mxu0
    %v658 = vadd.f32 0.0, %v657
    %659 = vdwg.mxu0
    %660 = vrot.lane.b32.xlu0 %v52, 104
    %v661 = vpop.permute.xlu0 %660
    %662 = vrot.lane.b32.xlu0 %v52, 72
    %v663 = vpop.permute.xlu0 %662
    %v664 = vsel %vm62, %v661, 0
    %v666 = vsel %vm62, %v663, 0
    %668 = vmatpush.xpose.msra.mxu0 0.0
    %669 = vmatpush.xpose.msra.mxu0 0.0
    %670 = vmatpush.xpose.msra.mxu0 0.0
    %671 = vmatpush.xpose.msra.mxu0 0.0
    %672 = vmatpush.xpose.msra.mxu0 0.0
    %673 = vmatpush.xpose.msra.mxu0 0.0
    %674 = vmatpush.xpose.msra.mxu0 0.0
    %675 = vmatpush.xpose.msra.mxu0 0.0
    %676 = vmatpush.xpose.msra.mxu0 0.0
    %677 = vmatpush.xpose.msra.mxu0 0.0
    %678 = vmatpush.xpose.msra.mxu0 0.0
    %679 = vmatpush.xpose.msra.mxu0 0.0
    %680 = vmatpush.xpose.msra.mxu0 0.0
    %681 = vmatpush.xpose.msra.mxu0 0.0
    %682 = vmatpush.xpose.msra.mxu0 0.0
    %683 = vmatpush.xpose.msra.mxu0 %v666
    %684 = vmatmul.f32.gmra.mxu0 %v664
    %v685 = vpop.f32.mrf.mxu0
    %v686 = vadd.f32 0.0, %v685
    %687 = vdwg.mxu0
    %v688 = vsel %vm115, %v658, -1e+30
    %v689 = vsel %vm115, %v686, -1e+30
    %v690 = vsel %vm62, %v688, -inf
    %691 = vmax.xlane.f32.xlu0 %v690
    %v692 = vpop.xlane.xlu0 %691
    %v693 = vsel %vm62, %v689, -inf
    %694 = vmax.xlane.f32.xlu0 %v693
    %v695 = vpop.xlane.xlu0 %694
    %v696 = vsub.f32 %v688, %v692
    %v697 = vsub.f32 %v689, %v695
    %v698 = vmul.f32 %v696, 1.442695
    %v699 = vpow.pop %v698
    %v700 = vmul.f32 %v697, 1.442695
    %v701 = vpow.pop %v700
    %v702 = vsel %vm62, %v699, 0.0
    %703 = vadd.xlane.f32.xlu0 %v702
    %v704 = vpop.xlane.xlu0 %703
    %v705 = vsel %vm62, %v701, 0.0
    %706 = vadd.xlane.f32.xlu0 %v705
    %v707 = vpop.xlane.xlu0 %706
    %v708 = vrcp.pop %v704
    %v709 = vmul.f32 %v704, %v708
    %v710 = vsub.f32 1.0, %v709
    %v711 = vmul.f32 %v708, %v710
    %v712 = vadd.f32 %v708, %v711
    %vm713 = vweird.f32 %v704
    %vm714 = vweird.f32 %v708
    %vm715 = vmor %vm713, %vm714
    %v716 = vsel %vm715, %v708, %v712
    %v717 = vand.u32 2147483647, %v704
    %vm718 = vcmp.eq.f32.partialorder %v717, 8.507059e+37
    %v719 = vand.u32 %v704, 2147483648
    %v720 = vor.u32 1.1754944e-38, %v719
    %v721 = vsel %vm718, %v720, %v716
    %v722 = vmul.f32 1.0, %v721
    %v723 = vrcp.pop %v707
    %v724 = vmul.f32 %v707, %v723
    %v725 = vsub.f32 1.0, %v724
    %v726 = vmul.f32 %v723, %v725
    %v727 = vadd.f32 %v723, %v726
    %vm728 = vweird.f32 %v707
    %vm729 = vweird.f32 %v723
    %vm730 = vmor %vm728, %vm729
    %v731 = vsel %vm730, %v723, %v727
    %v732 = vand.u32 2147483647, %v707
    %vm733 = vcmp.eq.f32.partialorder %v732, 8.507059e+37
    %v734 = vand.u32 %v707, 2147483648
    %v735 = vor.u32 1.1754944e-38, %v734
    %v736 = vsel %vm733, %v735, %v731
    %v737 = vmul.f32 1.0, %v736
    %v738 = vmul.f32 %v699, %v722
    %v739 = vmul.f32 %v701, %v737
    %740 = vrot.lane.b32.xlu0 %v49, 40
    %v741 = vpop.permute.xlu0 %740
    %v744 = vsel %vm62, %v738, 0
    %746 = vmatpush.msra.mxu0 0.0
    %747 = vmatpush.msra.mxu0 0.0
    %748 = vmatpush.msra.mxu0 0.0
    %749 = vmatpush.msra.mxu0 0.0
    %750 = vmatpush.msra.mxu0 0.0
    %751 = vmatpush.msra.mxu0 0.0
    %752 = vmatpush.msra.mxu0 0.0
    %753 = vmatpush.msra.mxu0 0.0
    %754 = vmatpush.msra.mxu0 0.0
    %755 = vmatpush.msra.mxu0 0.0
    %756 = vmatpush.msra.mxu0 0.0
    %757 = vmatpush.msra.mxu0 0.0
    %758 = vmatpush.msra.mxu0 0.0
    %759 = vmatpush.msra.mxu0 0.0
    %760 = vmatpush.msra.mxu0 0.0
    %761 = vmatpush.msra.mxu0 %v741
    %762 = vmatmul.f32.gmra.mxu0 %v744
    %v763 = vpop.f32.mrf.mxu0
    %v764 = vadd.f32 0.0, %v763
    %765 = vdwg.mxu0
    %766 = vrot.lane.b32.xlu0 %v52, 40
    %v767 = vpop.permute.xlu0 %766
    %v770 = vsel %vm62, %v739, 0
    %772 = vmatpush.msra.mxu0 0.0
    %773 = vmatpush.msra.mxu0 0.0
    %774 = vmatpush.msra.mxu0 0.0
    %775 = vmatpush.msra.mxu0 0.0
    %776 = vmatpush.msra.mxu0 0.0
    %777 = vmatpush.msra.mxu0 0.0
    %778 = vmatpush.msra.mxu0 0.0
    %779 = vmatpush.msra.mxu0 0.0
    %780 = vmatpush.msra.mxu0 0.0
    %781 = vmatpush.msra.mxu0 0.0
    %782 = vmatpush.msra.mxu0 0.0
    %783 = vmatpush.msra.mxu0 0.0
    %784 = vmatpush.msra.mxu0 0.0
    %785 = vmatpush.msra.mxu0 0.0
    %786 = vmatpush.msra.mxu0 0.0
    %787 = vmatpush.msra.mxu0 %v767
    %788 = vmatmul.f32.gmra.mxu0 %v770
    %v789 = vpop.f32.mrf.mxu0
    %v790 = vadd.f32 0.0, %v789
    %791 = vdwg.mxu0
    %v792 = vld [vmem:[%s2 + $0x18] sm:$0xff]
    %v794 = vsel %vm62, %v764, 0
    %v797 = vsel %vm62, %v790, 0
    %799 = vmatpush.msra.mxu0 0.0
    %800 = vmatpush.msra.mxu0 0.0
    %801 = vmatpush.msra.mxu0 0.0
    %802 = vmatpush.msra.mxu0 0.0
    %803 = vmatpush.msra.mxu0 0.0
    %804 = vmatpush.msra.mxu0 0.0
    %805 = vmatpush.msra.mxu0 0.0
    %806 = vmatpush.msra.mxu0 0.0
    %807 = vmatpush.msra.mxu0 0.0
    %808 = vmatpush.msra.mxu0 0.0
    %809 = vmatpush.msra.mxu0 0.0
    %810 = vmatpush.msra.mxu0 0.0
    %811 = vmatpush.msra.mxu0 0.0
    %812 = vmatpush.msra.mxu0 0.0
    %813 = vmatpush.msra.mxu0 0.0
    %814 = vmatpush.msra.mxu0 %v792
    %815 = vmatmul.f32.gmra.mxu0 %v794
    %v816 = vpop.f32.mrf.mxu0
    %v817 = vadd.f32 0.0, %v816
    %818 = vmatmul.f32.gmra.mxu0 %v797
    %v819 = vpop.f32.mrf.mxu0
    %v820 = vadd.f32 0.0, %v819
    %821 = vdwg.mxu0
    %v822 = vadd.f32 %v630, %v817
    %v823 = vadd.f32 %v631, %v820
    %v824 = vld [vmem:[%s3] sm:$0x1]
    %v826 = vperm.slane %v824, 0
    %v828 = vadd.f32 %v822, %v826
    %v829 = vadd.f32 %v823, %v826
    %830 = vst.msk [vmem:[#allocation2] sm:$0xff] %vm24, %v828
    %831 = vst.msk [vmem:[#allocation2 + $0x8] sm:$0xff] %vm24, %v829
    // Predicated region
    $region18: #{multi_head_attention.1} parent=1 // pred_check
      _
    $region19: #{multi_head_attention.1} parent=1 // pred_check_branch
      %833 = sbr.rel (0) target = $region21
    $region20: #{multi_head_attention.1} parent=1 // pred_region
      %835 = vsyncadd [#allocation3], 0
      %s836 = sshll.u32 [#allocation2], 4
      %s837 = int_to_ptr.vmem [resolvable:$true] %s836
      %s838 = sshll.u32 %s4, 4
      %s839 = int_to_ptr.hbm [resolvable:$true] %s838
      %844 = dma.vmem_to_hbm [thread:$0]  %s837, 256, %s839, [#allocation3], 128, 128, 8
    $region21: #{multi_head_attention.1} parent=1 // pred_fallthru
      _
    // Predicated region
    $region22: #{multi_head_attention.1} parent=1 // pred_check
      _
    $region23: #{multi_head_attention.1} parent=1 // pred_check_branch
      %846 = sbr.rel (0) target = $region25
    $region24: #{multi_head_attention.1} parent=1 // pred_region
      %848 = dma.done [#allocation3], 256
    $region25: #{multi_head_attention.1} parent=1 // pred_fallthru
      _
    %849 = vsyncpa [#allocation3], 1

</llo_original>
